<compile_context>
chip_gen: v7x
topology: tpu7x:2x2x1
jax: 0.10.0
libtpu: 0.0.40
codegen_flags: <defaults>
</compile_context>

<pallas_src>
import jax
import jax.numpy as jnp
from jax.experimental import pallas as pl
from jax.experimental.pallas import tpu as pltpu

_MIB = 1 << 20


def bert_pool_kernel(x_ref, wt_ref, b_ref, o_ref):
    # x_ref : (TB, H)   bf16 activation tile
    # wt_ref: (H, H)    bf16 pre-transposed weight (K, N) -- VMEM resident
    # b_ref : (1, H)    f32 bias -- VMEM resident
    # o_ref : (TB, H)   output tile
    y = jnp.dot(x_ref[...], wt_ref[...], preferred_element_type=jnp.float32)
    # Bias add on the VPU, tanh on the EUP slot; both hidden under the MXU.
    o_ref[...] = jnp.tanh(y + b_ref[...]).astype(o_ref.dtype)


def _vmem_capacity_bytes():
    """Per-core VMEM capacity; conservative 64 MiB (v7x) fallback."""
    try:
        info = pltpu.get_tpu_info()
        cap = getattr(info, "vmem_capacity_bytes", None)
        if cap:
            return int(cap)
    except Exception:
        pass
    return 64 * _MIB


def _choose_block_b(B, H, act_bytes, out_bytes, resident_bytes, per_row_bytes,
                    budget_bytes):
    """Largest HW-friendly batch tile that fits VMEM; split for megacore when useful."""
    avail = max(budget_bytes - resident_bytes, 8 * per_row_bytes)
    max_rows = max(8, avail // per_row_bytes)
    if max_rows >= 256:
        max_rows = (max_rows // 128) * 128      # MXU M-pass friendly
    else:
        max_rows = max(8, (max_rows // 8) * 8)

    if B <= max_rows:
        act_traffic = B * H * (act_bytes + out_bytes)
        weight_traffic = resident_bytes          # ~ the H*H weight HBM read
        if B < 16 or act_traffic < weight_traffic:
            # Weight-read-bound: one grid step; don't make both TCs re-read W.
            return B
        # Enough activation work: split into two blocks so both v7x TCs work.
        half = -(-B // 2)
        half = -(-half // 8) * 8
        return min(half, max_rows)
    return max_rows


def bert_pool(hidden_states, weight, bias, *, block_b=None,
              compute_dtype=jnp.bfloat16):
    """hidden_states: (B, H, S); weight: (H, H); bias: (H,) -> (B, H)."""
    B, H, S = hidden_states.shape
    out_dtype = hidden_states.dtype

    # Layout plumbing in the wrapper (done once, fusable by XLA):
    #   * slice the "first token" (last axis, index 0) -> lane-dense (B, H)
    #   * cast activations/weight to bf16, pre-transpose weight to (K, N)
    x2d = hidden_states[:, :, 0].astype(compute_dtype)     # (B, H)
    w_t = weight.T.astype(compute_dtype)                    # (H_in, H_out)
    bias2d = bias.astype(jnp.float32).reshape(1, H)         # f32 bias

    act_bytes = jnp.dtype(compute_dtype).itemsize
    out_bytes = jnp.dtype(out_dtype).itemsize

    cap = _vmem_capacity_bytes()
    budget = min(cap - 8 * _MIB, int(cap * 0.75))

    # Resident operands: weight + bias, counted at their default 2x buffering.
    resident = 2 * w_t.size * act_bytes + 2 * bias2d.size * 4
    # Per-batch-row cost: double-buffered input + output tiles, f32 dot/tanh temps.
    per_row = H * (2 * act_bytes + 2 * out_bytes) + H * 8

    if block_b is None:
        block_b = _choose_block_b(B, H, act_bytes, out_bytes, resident, per_row,
                                  budget)
    grid_len = pl.cdiv(B, block_b)

    # Explicit scoped-VMEM request: actual need + headroom, never above capacity.
    need = resident + block_b * per_row + 4 * _MIB
    vmem_limit = int(min(max(need, 16 * _MIB), cap - 4 * _MIB))

    # Megacore sharding only pays when there are >= 2 grid steps.
    dim_sem = ("parallel",) if grid_len > 1 else ("arbitrary",)

    return pl.pallas_call(
        bert_pool_kernel,
        out_shape=jax.ShapeDtypeStruct((B, H), out_dtype),
        grid_spec=pltpu.PrefetchScalarGridSpec(
            num_scalar_prefetch=0,
            grid=(grid_len,),
            in_specs=[
                pl.BlockSpec((block_b, H), lambda i: (i, 0)),  # activations (tiled over B)
                pl.BlockSpec((H, H), lambda i: (0, 0)),        # W.T, fetched once, resident
                pl.BlockSpec((1, H), lambda i: (0, 0)),        # bias, resident
            ],
            out_specs=pl.BlockSpec((block_b, H), lambda i: (i, 0)),
        ),
        compiler_params=pltpu.CompilerParams(
            dimension_semantics=dim_sem,
            vmem_limit_bytes=vmem_limit,
            # Allow the slice+cast producer of the activation operand to fuse
            # into the Pallas call; keep the weight transpose materialized once.
            allow_input_fusion=[True, False, False],
        ),
    )(x2d, w_t, bias2d)


def bert_pool_ref(hidden_states, weight, bias):
    x = hidden_states[:, :, 0].astype(jnp.float32)
    return jnp.tanh(x @ weight.astype(jnp.float32).T + bias.astype(jnp.float32))


if __name__ == "__main__":
    B, H, S = 2, 32, 8
    key = jax.random.PRNGKey(0)
    k_h, k_w, k_b = jax.random.split(key, 3)

    hidden_states = jax.random.normal(k_h, (B, H, S), dtype=jnp.float32)
    # Deterministic synthetic parameters for nn.Linear(H, H)
    weight = jax.random.normal(k_w, (H, H), dtype=jnp.float32) * 0.05
    bias = jax.random.normal(k_b, (H,), dtype=jnp.float32) * 0.05

    out = jax.block_until_ready(jax.jit(bert_pool)(hidden_states, weight, bias))
    ref = bert_pool_ref(hidden_states, weight, bias)

    assert out.shape == (B, H)
    # bf16 inputs with f32 accumulation: loosen tolerance accordingly.
    assert jnp.allclose(out.astype(jnp.float32), ref, atol=2e-2, rtol=2e-2)
    print("KERNEL_OK")
</pallas_src>

<mosaic_0001>
module attributes {stable_mosaic.version = 11 : i64} {
  func.func @bert_pool_kernel(%arg0: i32, %arg1: memref<2x32xbf16, #tpu.memory_space<vmem>>, %arg2: memref<32x32xbf16, #tpu.memory_space<vmem>>, %arg3: memref<1x32xf32, #tpu.memory_space<vmem>>, %arg4: memref<2x32xf32, #tpu.memory_space<vmem>>) attributes {dimension_semantics = [#tpu.dimension_semantics<arbitrary>], iteration_bounds = array<i64: 1>, scalar_prefetch = 0 : i64, scratch_operands = 0 : i64, tpu.core_type = #tpu.core_type<tc>, window_params = [{transform_indices = @transform_0, window_bounds = array<i64: 2, 32>}, {pipeline_mode = #tpu.pipeline_mode<synchronous>, transform_indices = @transform_1, window_bounds = array<i64: 32, 32>}, {pipeline_mode = #tpu.pipeline_mode<synchronous>, transform_indices = @transform_2, window_bounds = array<i64: 1, 32>}, {transform_indices = @transform_3, window_bounds = array<i64: 2, 32>}]} {
    %c0 = arith.constant 0 : index
    %c0_0 = arith.constant 0 : index
    %0 = vector.load %arg1[%c0, %c0_0] : memref<2x32xbf16, #tpu.memory_space<vmem>>, vector<2x32xbf16>
    %c0_1 = arith.constant 0 : index
    %c0_2 = arith.constant 0 : index
    %1 = vector.load %arg2[%c0_1, %c0_2] : memref<32x32xbf16, #tpu.memory_space<vmem>>, vector<32x32xbf16>
    %cst = arith.constant dense<0.000000e+00> : vector<2x32xf32>
    %2 = tpu.matmul %0, %1, %cst {dimension_numbers = #tpu.dot_dimension_numbers<[1], [0], [0], [1], [0, 0, 1, 1], [], []>} : vector<2x32xbf16>, vector<32x32xbf16>, vector<2x32xf32> -> vector<2x32xf32>
    %c0_3 = arith.constant 0 : index
    %c0_4 = arith.constant 0 : index
    %3 = vector.load %arg3[%c0_3, %c0_4] : memref<1x32xf32, #tpu.memory_space<vmem>>, vector<1x32xf32>
    %4 = vector.broadcast %3 : vector<1x32xf32> to vector<2x32xf32>
    %5 = arith.addf %2, %4 : vector<2x32xf32>
    %6 = math.tanh %5 : vector<2x32xf32>
    %c0_5 = arith.constant 0 : index
    %c0_6 = arith.constant 0 : index
    %7 = vector.load %arg4[%c0_5, %c0_6] : memref<2x32xf32, #tpu.memory_space<vmem>>, vector<2x32xf32>
    tpu.vector_store %arg4[%c0_5, %c0_6], %6 {strides = array<i32>} : memref<2x32xf32, #tpu.memory_space<vmem>>, vector<2x32xf32>,
    return
  }
  func.func @transform_0(%arg0: i32) -> (i32, i32) {
    %c0_i32 = arith.constant 0 : i32
    %c0_i32_0 = arith.constant 0 : i32
    return %arg0, %c0_i32 : i32, i32
  }
  func.func @transform_1(%arg0: i32) -> (i32, i32) {
    %c0_i32 = arith.constant 0 : i32
    %c0_i32_0 = arith.constant 0 : i32
    %c0_i32_1 = arith.constant 0 : i32
    return %c0_i32, %c0_i32_0 : i32, i32
  }
  func.func @transform_2(%arg0: i32) -> (i32, i32) {
    %c0_i32 = arith.constant 0 : i32
    %c0_i32_0 = arith.constant 0 : i32
    %c0_i32_1 = arith.constant 0 : i32
    return %c0_i32, %c0_i32_0 : i32, i32
  }
  func.func @transform_3(%arg0: i32) -> (i32, i32) {
    %c0_i32 = arith.constant 0 : i32
    %c0_i32_0 = arith.constant 0 : i32
    return %arg0, %c0_i32 : i32, i32
  }
}

</mosaic_0001>

<llo_original>
// kernel: bert_pool.2
$region0: #{bert_pool.2}
  #allocation0 [shape = 'u32[]', space=smem, size = 0x4, offset = 0x4, fixed_abs, tag = 'smem constant byte address 0x4 - core index']
  #allocation1 [shape = 'u32[144,128]{1,0:T(1,128)}', space=vmem, size = 0x12000, scoped, tag = 'internal scratch']
  %s0 = inlined_call_operand.vmem [shape: bf16[32,32], index: 0, kind: input, shape index: {}]
  %s1 = inlined_call_operand.vmem [shape: f32[1,32], index: 1, kind: input, shape index: {}]
  %s2 = inlined_call_operand.vmem [shape: bf16[2,32,1], index: 2, kind: input, shape index: {}]
  %s3 = inlined_call_operand.hbm [shape: f32[2,32], index: 3, kind: output, shape index: {}]
  %s4 = sld [smem:[#allocation0]]
  $region22: #{bert_pool.2} parent=0
    _
  %s6 = ssub.s32 1, %s4
  %s7 = scalar_select 0, %s6, %s4
  $region1: #{bert_pool.2} parent=0
    #allocation2 [shape = 'u8[1024]{0}', space=vmem, size = 0x400, scoped, tag = 'output window, operand 0, single buffered']
    #allocation3 [shape = 's32[1]{0}', space=sflag, size = 0x4, scoped, tag = 'scoped memory for bert_pool.2']
    #allocation4 [shape = 'u8[512]{0}', space=vmem, size = 0x400, dematerialized = true, scoped, tag = 'FusionAdapter Buffer %fusion.1 = bf16[2,32]{1,0:T(2,128)(2,1)} fusion(%param_2.1), kind=kLoop, calls=%fused_computation.3.clone']
    %8 = vsyncpa [#allocation3], 0
    // Predicated region
    $region2: #{bert_pool.2} parent=1 // pred_check
      _
    $region3: #{bert_pool.2} parent=1 // pred_check_branch
      %10 = sbr.rel (0) target = $region5
    $region4: #{bert_pool.2} parent=1 // pred_region
      _
    $region5: #{bert_pool.2} parent=1 // pred_fallthru
      _
    // Predicated region
    $region6: #{bert_pool.2} parent=1 // pred_check
      _
    $region7: #{bert_pool.2} parent=1 // pred_check_branch
      %12 = sbr.rel (0) target = $region9
    $region8: #{bert_pool.2} parent=1 // pred_region
      _
    $region9: #{bert_pool.2} parent=1 // pred_fallthru
      _
    // Predicated region
    $region10: #{bert_pool.2} parent=1 // pred_check
      _
    $region11: #{bert_pool.2} parent=1 // pred_check_branch
      %14 = sbr.rel (0) target = $region13
    $region12: #{bert_pool.2} parent=1 // pred_region
      _
    $region13: #{bert_pool.2} parent=1 // pred_fallthru
      _
    %s16 = sor.u32 3, 1
    %s17 = sand.u32 %s16, 1
    %v18 = vld [vmem:[%s2] sm:%s17]
    %v19 = vunpack.c.l.bf16 %v18
    %v20 = vunpack.c.h.bf16 %v18
    %v21 = vpack.c.bf16 0.0, %v19
    %23 = vst [vmem:[#allocation4] sm:$0x1] %v21
    %v25 = vld [vmem:[#allocation4] sm:$0x1]
    %v26 = vld [vmem:[%s0] sm:$0xf]
    %v27 = vld [vmem:[%s0 + $0x4] sm:$0xf]
    %v28 = vld [vmem:[%s0 + $0x8] sm:$0xf]
    %v29 = vld [vmem:[%s0 + $0xc] sm:$0xf]
    %v30 = vld [vmem:[%s1] sm:$0x1]
    %v32 = vlaneseq
    %v33 = vshrl.u32 %v32, 7
    %v34 = vsub.s32 0, %v33
    %v35 = vrot.slane %v30, %v34
    %v41 = vunpack.c.l.b16 %v26
    %v42 = vunpack.c.l.b16 %v27
    %v43 = vunpack.c.l.b16 %v28
    %v44 = vunpack.c.l.b16 %v29
    %v45 = vpack.c.b16 %v42, %v41
    %v46 = vpack.c.b16 %v44, %v43
    %vm49 = vcmask 261120
    %v51 = vsel %vm49, %v25, 0
    %53 = vmatprep.subr.bf16.mxu0 0
    %54 = vmatpush1.bf16.msra.mxu0 %v45
    %55 = vmatprep.subr.bf16.mxu0 0
    %56 = vmatpush1.bf16.msra.mxu0 %v46
    %57 = vmatprep.subr.bf16.mxu0 0
    %58 = vmatpush1.bf16.msra.mxu0 0
    %59 = vmatprep.subr.bf16.mxu0 0
    %60 = vmatpush1.bf16.msra.mxu0 0
    %61 = vmatprep.subr.bf16.mxu0 0
    %62 = vmatpush1.bf16.msra.mxu0 0
    %63 = vmatprep.subr.bf16.mxu0 0
    %64 = vmatpush1.bf16.msra.mxu0 0
    %65 = vmatprep.subr.bf16.mxu0 0
    %66 = vmatpush1.bf16.msra.mxu0 0
    %67 = vmatprep.subr.bf16.mxu0 0
    %68 = vmatpush1.bf16.msra.mxu0 0
    %69 = vmatprep.subr.bf16.mxu0 0
    %70 = vmatpush1.bf16.msra.mxu0 0
    %71 = vmatprep.subr.bf16.mxu0 0
    %72 = vmatpush1.bf16.msra.mxu0 0
    %73 = vmatprep.subr.bf16.mxu0 0
    %74 = vmatpush1.bf16.msra.mxu0 0
    %75 = vmatprep.subr.bf16.mxu0 0
    %76 = vmatpush1.bf16.msra.mxu0 0
    %77 = vmatprep.subr.bf16.mxu0 0
    %78 = vmatpush1.bf16.msra.mxu0 0
    %79 = vmatprep.subr.bf16.mxu0 0
    %80 = vmatpush1.bf16.msra.mxu0 0
    %81 = vmatprep.subr.bf16.mxu0 0
    %82 = vmatpush1.bf16.msra.mxu0 0
    %83 = vmatprep.subr.bf16.mxu0 0
    %84 = vmatpush1.bf16.msra.mxu0 0
    %85 = vmatprep.mubr.bf16.mxu0 0
    %86 = vmatmul.mubr.bf16.gmra.mrb[0].mxu0 %v51
    %v87 = vpop.f32.mrb[0].mxu0
    %v88 = vadd.f32 %v35, %v87
    %v89 = vpop.f32.mrb[0].mxu0
    %v90 = vpop.f32.mrb[0].mxu0
    %v91 = vpop.f32.mrb[0].mxu0
    %92 = vdwg.mxu0
    %v93 = vtanh.pop %v88
    %vm94 = vcmask 254976
    %95 = vst.msk [vmem:[#allocation2] sm:$0x3] %vm94, %v93
    // Predicated region
    $region14: #{bert_pool.2} parent=1 // pred_check
      _
    $region15: #{bert_pool.2} parent=1 // pred_check_branch
      %97 = sbr.rel (0) target = $region17
    $region16: #{bert_pool.2} parent=1 // pred_region
      %s99 = ssub.s32 32, 32
      %100 = vsyncadd [#allocation3], %s99
      %s102 = sshll.u32 [#allocation2], 4
      %s103 = int_to_ptr.vmem [resolvable:$true] %s102
      %105 = dma.vmem_to_hbm [thread:$0]  %s103, 32, %s3, [#allocation3]
    $region17: #{bert_pool.2} parent=1 // pred_fallthru
      _
    // Predicated region
    $region18: #{bert_pool.2} parent=1 // pred_check
      _
    $region19: #{bert_pool.2} parent=1 // pred_check_branch
      %107 = sbr.rel (0) target = $region21
    $region20: #{bert_pool.2} parent=1 // pred_region
      %108 = dma.done [#allocation3], 32
    $region21: #{bert_pool.2} parent=1 // pred_fallthru
      _
    %109 = vsyncpa [#allocation3], 1

</llo_original>
